<compile_context>
chip_gen: v6e
topology: v6e:2x2x1
jax: 0.10.0
libtpu: 0.0.40
codegen_flags: <defaults>
</compile_context>

<pallas_src>
import functools

import jax
import jax.numpy as jnp
from jax.experimental import pallas as pl
from jax.experimental.pallas import tpu as pltpu


# ---------------------------------------------------------------------------
# Kernels
# ---------------------------------------------------------------------------

def _ntxent_row_kernel(z_row_ref, z_all_t_ref, z_pair_ref, out_ref, *,
                       inv_temperature: float, row_tile: int,
                       use_bf16_matmul: bool, fast_diag: bool):
    """loss_r = logsumexp_{c != r}(sim[r, c]) - sim[r, pair(r)] for rows of this tile."""
    i = pl.program_id(0)
    n = z_all_t_ref.shape[1]

    # Fold 1/T into the small (TR, D) LHS tile: O(TR*D) VPU work, not O(TR*N).
    z_row_raw = z_row_ref[...].astype(jnp.float32)                         # (TR, D)
    z_row = z_row_raw * jnp.float32(inv_temperature)                       # (TR, D)
    z_pair = z_pair_ref[...].astype(jnp.float32)                           # (TR, D)

    # Positive logit = <z_r, z_pair(r)> / T as a row-wise pair dot product.
    pos = jnp.sum(z_row * z_pair, axis=1, keepdims=True)                   # (TR, 1)

    lhs = z_row.astype(jnp.bfloat16) if use_bf16_matmul else z_row
    # RHS was transposed once in HBM to (D, N): canonical (M,K)x(K,N) MXU feed,
    # no per-grid-step XLU transpose of the resident operand.
    sim = jax.lax.dot_general(
        lhs, z_all_t_ref[...],
        dimension_numbers=(((1,), (0,)), ((), ())),
        preferred_element_type=jnp.float32)                                # (TR, N)

    if fast_diag:
        # Mask-free path: LSE over the unmasked row, then subtract the self term
        # exp(self - max).  Removes the (TR, N) cmp+select pass and one (TR, N)
        # temporary.  Only safe when the self-similarity does not dominate every
        # other logit (e.g. L2-normalized embeddings); otherwise catastrophic
        # cancellation -- keep the masked path (default) for arbitrary inputs.
        self_sim = jnp.sum(z_row * z_row_raw, axis=1, keepdims=True)       # (TR, 1)
        row_max = jnp.max(sim, axis=1, keepdims=True)
        sum_exp = jnp.sum(jnp.exp(sim - row_max), axis=1, keepdims=True)
        sum_exp = jnp.maximum(sum_exp - jnp.exp(self_sim - row_max),
                              jnp.float32(1e-30))
        lse = row_max + jnp.log(sum_exp)
    else:
        # Mask only the diagonal entries that fall inside this row block:
        # one (TR, N) lane iota + one (TR, 1) sublane iota.
        col_ids = jax.lax.broadcasted_iota(jnp.int32, (row_tile, n), 1)
        row_ids = jax.lax.broadcasted_iota(jnp.int32, (row_tile, 1), 0) + i * row_tile
        masked = jnp.where(col_ids == row_ids, jnp.float32(-1e30), sim)
        row_max = jnp.max(masked, axis=1, keepdims=True)
        sum_exp = jnp.sum(jnp.exp(masked - row_max), axis=1, keepdims=True)
        lse = row_max + jnp.log(sum_exp)

    out_ref[...] = lse - pos                                               # (TR, 1)


def _ntxent_flash_kernel(z_row_ref, z_col_t_ref, z_pair_ref, out_ref,
                         m_sc, l_sc, *, inv_temperature: float,
                         row_tile: int, col_tile: int, use_bf16_matmul: bool):
    """Column-tiled online logsumexp: grid = (row tiles, col tiles), col axis last."""
    i = pl.program_id(0)
    j = pl.program_id(1)

    @pl.when(j == 0)
    def _init():
        m_sc[...] = jnp.full(m_sc.shape, -jnp.inf, dtype=jnp.float32)
        l_sc[...] = jnp.zeros(l_sc.shape, dtype=jnp.float32)

    z_row = z_row_ref[...].astype(jnp.float32) * jnp.float32(inv_temperature)  # (TR, D)
    lhs = z_row.astype(jnp.bfloat16) if use_bf16_matmul else z_row
    sim = jax.lax.dot_general(
        lhs, z_col_t_ref[...],
        dimension_numbers=(((1,), (0,)), ((), ())),
        preferred_element_type=jnp.float32)                                # (TR, TC)

    col_ids = (jax.lax.broadcasted_iota(jnp.int32, (row_tile, col_tile), 1)
               + j * col_tile)
    row_ids = (jax.lax.broadcasted_iota(jnp.int32, (row_tile, 1), 0)
               + i * row_tile)
    sim = jnp.where(col_ids == row_ids, jnp.float32(-1e30), sim)

    m_prev = m_sc[...]
    m_new = jnp.maximum(m_prev, jnp.max(sim, axis=1, keepdims=True))
    alpha = jnp.exp(m_prev - m_new)
    l_sc[...] = alpha * l_sc[...] + jnp.sum(jnp.exp(sim - m_new), axis=1,
                                            keepdims=True)
    m_sc[...] = m_new

    @pl.when(j == pl.num_programs(1) - 1)
    def _finalize():
        z_pair = z_pair_ref[...].astype(jnp.float32)
        pos = jnp.sum(z_row * z_pair, axis=1, keepdims=True)
        out_ref[...] = m_sc[...] + jnp.log(l_sc[...]) - pos


# ---------------------------------------------------------------------------
# Tiling / VMEM policy
# ---------------------------------------------------------------------------

_TILE_CANDIDATES = (1024, 512, 256, 128)


def _vmem_budget_bytes() -> int:
    """~0.8x of this generation's physical VMEM (v5e/v6e 128 MiB, v7x 64 MiB)."""
    try:
        cap = int(pltpu.get_tpu_info().vmem_capacity_bytes)
    except Exception:
        cap = 64 * 1024 * 1024   # conservative fallback: v7x per-TC VMEM
    return (cap * 4) // 5


def _row_vmem_bytes(n, d_pad, tr, rhs_elem_bytes, rhs_buffers):
    return (rhs_buffers * n * d_pad * rhs_elem_bytes   # resident (D, N) RHS
            + 2 * 2 * tr * d_pad * 4                   # double-buffered row + pair tiles
            + 4 * tr * n * 4                           # (TR, N) sim block + temporaries
            + 2 * tr * 4)                              # (TR, 1) output


def _choose_row_tile(n, d_pad, rhs_elem_bytes, budget):
    """Largest 128-aligned row tile dividing N that fits the budget with a
    single-buffered resident RHS; prefers an even tile count (v7x megacore).
    Returns None when the resident-RHS path cannot fit -> use the flash path."""
    divisors = [t for t in _TILE_CANDIDATES if n % t == 0]
    if not divisors:
        return n   # tiny / odd N: single whole-array tile
    fitting = [t for t in divisors
               if _row_vmem_bytes(n, d_pad, t, rhs_elem_bytes, 1) <= budget]
    if not fitting:
        return None
    best = fitting[0]
    for t in fitting:                       # descending; at most one halving of TR
        if (n // t) % 2 == 0 and 2 * t >= best:
            return t
    return best


def _flash_vmem_bytes(n, d_pad, tr, tc, rhs_elem_bytes):
    return (2 * 2 * tr * d_pad * 4          # double-buffered row + pair tiles
            + 2 * d_pad * tc * rhs_elem_bytes  # double-buffered column tile
            + 4 * tr * tc * 4               # (TR, TC) sim block + temporaries
            + 6 * tr * 4)                   # m/l scratch + output


def _choose_flash_tiles(n, d_pad, rhs_elem_bytes, budget):
    divisors = [t for t in _TILE_CANDIDATES if n % t == 0]
    if not divisors:
        return n, n
    even = [t for t in divisors if (n // t) % 2 == 0]
    row_order = even + [t for t in divisors if t not in even]
    for tr in row_order:
        for tc in divisors:
            if _flash_vmem_bytes(n, d_pad, tr, tc, rhs_elem_bytes) <= budget:
                return tr, tc
    return divisors[-1], divisors[-1]


# ---------------------------------------------------------------------------
# Wrapper
# ---------------------------------------------------------------------------

def nt_xent_loss(z_i: jax.Array, z_j: jax.Array, temperature: float, *,
                 use_bf16_matmul: bool = False,
                 fast_diag: bool = False,
                 force_column_tiled: bool = False) -> jax.Array:
    assert z_i.shape == z_j.shape and z_i.ndim == 2
    batch, d = z_i.shape
    n = 2 * batch
    inv_t = 1.0 / float(temperature)

    # Glue: concatenation / padding / one-time transpose are layout plumbing done
    # by XLA in HBM; the hot path (matmul + masked softmax) is inside the kernel.
    z = jnp.concatenate([z_i, z_j], axis=0).astype(jnp.float32)            # (N, D)
    z_pair = jnp.concatenate([z_j, z_i], axis=0).astype(jnp.float32)       # (N, D)

    # Pad the feature dim to a lane-aligned multiple of 128 (zero columns leave
    # all dot products unchanged).
    d_pad = max(128, ((d + 127) // 128) * 128)
    if d_pad != d:
        pad = ((0, 0), (0, d_pad - d))
        z = jnp.pad(z, pad)
        z_pair = jnp.pad(z_pair, pad)

    # bf16 MXU path is fast on every generation (v5e's MXU is bf16-native) and
    # halves the resident RHS footprint; LSE / exp / positive-dot stay f32.
    rhs_dtype = jnp.bfloat16 if use_bf16_matmul else jnp.float32
    rhs_elem = 2 if use_bf16_matmul else 4
    # Pre-transpose once so the resident / column operand is already in (K, N)
    # weight layout; avoids any per-grid-step XLU transpose inside the kernel.
    z_rhs_t = jnp.transpose(z).astype(rhs_dtype)                           # (d_pad, N)

    budget = _vmem_budget_bytes()

    def _run_row_path(tr, single_buffer_rhs):
        num_tiles = n // tr
        kernel = functools.partial(
            _ntxent_row_kernel, inv_temperature=inv_t, row_tile=tr,
            use_bf16_matmul=use_bf16_matmul, fast_diag=fast_diag)
        rhs_kwargs = {}
        if single_buffer_rhs:
            # Constant block index -> double buffering only wastes an N*D VMEM copy.
            rhs_kwargs["pipeline_mode"] = pl.Buffered(1)
        rhs_spec = pl.BlockSpec((d_pad, n), lambda i: (0, 0), **rhs_kwargs)
        est = _row_vmem_bytes(n, d_pad, tr, rhs_elem, 1 if single_buffer_rhs else 2)
        vmem_limit = int(min(max(est * 5 // 4, 32 * 1024 * 1024), budget))
        return pl.pallas_call(
            kernel,
            out_shape=jax.ShapeDtypeStruct((n, 1), jnp.float32),
            grid=(num_tiles,),
            in_specs=[
                pl.BlockSpec((tr, d_pad), lambda i: (i, 0)),   # row tile of z (LHS)
                rhs_spec,                                      # full z.T, resident
                pl.BlockSpec((tr, d_pad), lambda i: (i, 0)),   # positive-partner tile
            ],
            out_specs=pl.BlockSpec((tr, 1), lambda i: (i, 0)),
            compiler_params=pltpu.CompilerParams(
                dimension_semantics=("parallel",),
                vmem_limit_bytes=vmem_limit),
            cost_estimate=pl.CostEstimate(
                flops=2 * n * n * d_pad + 6 * n * n + 4 * n * d_pad,
                transcendentals=n * n + n,
                # Resident RHS is fetched once, not once per tile.
                bytes_accessed=n * d_pad * rhs_elem + 2 * n * d_pad * 4 + n * 4),
        )(z, z_rhs_t, z_pair)

    def _run_flash_path(tr, tc):
        num_r, num_c = n // tr, n // tc
        kernel = functools.partial(
            _ntxent_flash_kernel, inv_temperature=inv_t, row_tile=tr,
            col_tile=tc, use_bf16_matmul=use_bf16_matmul)
        est = _flash_vmem_bytes(n, d_pad, tr, tc, rhs_elem)
        vmem_limit = int(min(max(est * 3 // 2, 32 * 1024 * 1024), budget))
        return pl.pallas_call(
            kernel,
            out_shape=jax.ShapeDtypeStruct((n, 1), jnp.float32),
            grid=(num_r, num_c),
            in_specs=[
                pl.BlockSpec((tr, d_pad), lambda i, j: (i, 0)),   # row tile of z
                pl.BlockSpec((d_pad, tc), lambda i, j: (0, j)),   # column tile of z.T
                pl.BlockSpec((tr, d_pad), lambda i, j: (i, 0)),   # partner row tile
            ],
            out_specs=pl.BlockSpec((tr, 1), lambda i, j: (i, 0)),
            scratch_shapes=[pltpu.VMEM((tr, 1), jnp.float32),     # running max
                            pltpu.VMEM((tr, 1), jnp.float32)],    # running sum-exp
            compiler_params=pltpu.CompilerParams(
                dimension_semantics=("parallel", "arbitrary"),
                vmem_limit_bytes=vmem_limit),
            cost_estimate=pl.CostEstimate(
                flops=2 * n * n * d_pad + 8 * n * n + 4 * n * d_pad,
                transcendentals=2 * n * n + n,
                bytes_accessed=(n // tr) * n * d_pad * rhs_elem
                               + 2 * n * d_pad * 4 + n * 4),
        )(z, z_rhs_t, z_pair)

    tr = None if force_column_tiled else _choose_row_tile(n, d_pad, rhs_elem, budget)
    if tr is None:
        tr_f, tc_f = _choose_flash_tiles(n, d_pad, rhs_elem, budget)
        row_losses = _run_flash_path(tr_f, tc_f)
    else:
        try:
            row_losses = _run_row_path(tr, single_buffer_rhs=True)
        except Exception:
            # Fallback if this runtime rejects pl.Buffered(1) on the resident RHS.
            row_losses = _run_row_path(tr, single_buffer_rhs=False)

    return jnp.sum(row_losses) / jnp.float32(n)


# ---------------------------------------------------------------------------
# Pure-JAX reference (mirrors the PyTorch module exactly)
# ---------------------------------------------------------------------------

def _reference_nt_xent(z_i, z_j, temperature):
    b = z_i.shape[0]
    n = 2 * b
    z = jnp.concatenate([z_i, z_j], axis=0)
    sim = jnp.dot(z, z.T, precision=jax.lax.Precision.HIGHEST) / temperature
    pos = jnp.concatenate(
        [jnp.diagonal(sim, offset=b), jnp.diagonal(sim, offset=-b)], axis=0)
    row_ids = jnp.arange(n)[:, None]
    col_ids = jnp.arange(n)[None, :]
    masked = jnp.where(row_ids == col_ids, -jnp.inf, sim)
    lse = jax.scipy.special.logsumexp(masked, axis=1)
    return jnp.sum(lse - pos) / n


if __name__ == "__main__":
    key = jax.random.PRNGKey(0)
    k1, k2, k3, k4 = jax.random.split(key, 4)
    temperature = 0.5

    # Small shapes implied by the module: flat (batch, features) embeddings.
    batch, feat = 8, 32
    z_i = jax.random.normal(k1, (batch, feat), dtype=jnp.float32)
    z_j = jax.random.normal(k2, (batch, feat), dtype=jnp.float32)

    loss = nt_xent_loss(z_i, z_j, temperature)
    jax.block_until_ready(loss)
    ref = _reference_nt_xent(z_i, z_j, temperature)
    assert jnp.allclose(loss, ref, rtol=1e-4, atol=1e-4), (loss, ref)

    # Multi-tile row grid (N = 384 -> 3 row tiles of 128), resident-RHS path.
    batch2, feat2 = 192, 64
    z_i2 = jax.random.normal(k3, (batch2, feat2), dtype=jnp.float32)
    z_j2 = jax.random.normal(k4, (batch2, feat2), dtype=jnp.float32)
    loss2 = nt_xent_loss(z_i2, z_j2, temperature)
    jax.block_until_ready(loss2)
    ref2 = _reference_nt_xent(z_i2, z_j2, temperature)
    assert jnp.allclose(loss2, ref2, rtol=1e-4, atol=1e-4), (loss2, ref2)

    # Column-tiled online-LSE path (forced here at small N; chosen automatically
    # when the resident RHS would not fit the per-generation VMEM budget).
    loss2_flash = nt_xent_loss(z_i2, z_j2, temperature, force_column_tiled=True)
    jax.block_until_ready(loss2_flash)
    assert jnp.allclose(loss2_flash, ref2, rtol=1e-4, atol=1e-4), (loss2_flash, ref2)

    # bf16 MXU path (all generations). Logits lose ~3 decimal digits vs f32, so
    # compare with a correspondingly loose tolerance.
    loss_bf16 = nt_xent_loss(z_i2, z_j2, temperature, use_bf16_matmul=True)
    jax.block_until_ready(loss_bf16)
    assert jnp.allclose(loss_bf16, ref2, rtol=2e-2, atol=1e-1), (loss_bf16, ref2)

    # Mask-free self-subtraction path: safe for L2-normalized embeddings (the
    # usual SimCLR setup); opt-in because unnormalized inputs + small T cancel.
    z_i2n = z_i2 / jnp.linalg.norm(z_i2, axis=1, keepdims=True)
    z_j2n = z_j2 / jnp.linalg.norm(z_j2, axis=1, keepdims=True)
    loss_fast = nt_xent_loss(z_i2n, z_j2n, temperature, fast_diag=True)
    jax.block_until_ready(loss_fast)
    ref_fast = _reference_nt_xent(z_i2n, z_j2n, temperature)
    assert jnp.allclose(loss_fast, ref_fast, rtol=1e-3, atol=1e-3), (loss_fast, ref_fast)

    print("KERNEL_OK")
</pallas_src>

<mosaic_0001>
module attributes {stable_mosaic.version = 11 : i64} {
  func.func @_ntxent_row_kernel(%arg0: i32, %arg1: memref<16x128xf32, #tpu.memory_space<vmem>>, %arg2: memref<128x16xf32, #tpu.memory_space<vmem>>, %arg3: memref<16x128xf32, #tpu.memory_space<vmem>>, %arg4: memref<16x1xf32, #tpu.memory_space<vmem>>) attributes {dimension_semantics = [#tpu.dimension_semantics<parallel>], iteration_bounds = array<i64: 1>, scalar_prefetch = 0 : i64, scratch_operands = 0 : i64, tpu.core_type = #tpu.core_type<tc>, window_params = [{transform_indices = @transform_0, window_bounds = array<i64: 16, 128>}, {pipeline_mode = #tpu.pipeline_mode<synchronous>, transform_indices = @transform_1, window_bounds = array<i64: 128, 16>}, {transform_indices = @transform_2, window_bounds = array<i64: 16, 128>}, {transform_indices = @transform_3, window_bounds = array<i64: 16, 1>}]} {
    %c0 = arith.constant 0 : index
    %c0_0 = arith.constant 0 : index
    %0 = vector.load %arg1[%c0, %c0_0] : memref<16x128xf32, #tpu.memory_space<vmem>>, vector<16x128xf32>
    %cst = arith.constant 2.000000e+00 : f32
    %1 = vector.broadcast %cst : f32 to vector<16x128xf32>
    %2 = arith.mulf %0, %1 : vector<16x128xf32>
    %c0_1 = arith.constant 0 : index
    %c0_2 = arith.constant 0 : index
    %3 = vector.load %arg3[%c0_1, %c0_2] : memref<16x128xf32, #tpu.memory_space<vmem>>, vector<16x128xf32>
    %4 = arith.mulf %2, %3 : vector<16x128xf32>
    %cst_3 = arith.constant dense<0.000000e+00> : vector<16xf32>
    %5 = vector.multi_reduction <add>, %4, %cst_3 [1] : vector<16x128xf32> to vector<16xf32>
    %6 = vector.shape_cast %5 : vector<16xf32> to vector<16x1xf32>
    %c0_4 = arith.constant 0 : index
    %c0_5 = arith.constant 0 : index
    %7 = vector.load %arg2[%c0_4, %c0_5] : memref<128x16xf32, #tpu.memory_space<vmem>>, vector<128x16xf32>
    %cst_6 = arith.constant dense<0.000000e+00> : vector<16x16xf32>
    %8 = tpu.matmul %2, %7, %cst_6 {dimension_numbers = #tpu.dot_dimension_numbers<[1], [0], [0], [1], [0, 0, 1, 1], [], []>} : vector<16x128xf32>, vector<128x16xf32>, vector<16x16xf32> -> vector<16x16xf32>
    %9 = tpu.iota {dimensions = array<i32: 1>} : vector<16x16xi32>
    %10 = tpu.iota {dimensions = array<i32: 0>} : vector<16x1xi32>
    %c16_i32 = arith.constant 16 : i32
    %11 = arith.muli %arg0, %c16_i32 : i32
    %12 = vector.broadcast %11 : i32 to vector<16x1xi32>
    %13 = arith.addi %10, %12 : vector<16x1xi32>
    %14 = vector.broadcast %13 : vector<16x1xi32> to vector<16x16xi32>
    %15 = arith.cmpi eq, %9, %14 : vector<16x16xi32>
    %cst_7 = arith.constant -1.000000e+30 : f32
    %16 = vector.broadcast %cst_7 : f32 to vector<16x16xf32>
    %17 = arith.select %15, %16, %8 : vector<16x16xi1>, vector<16x16xf32>
    %cst_8 = arith.constant dense<0xFF800000> : vector<16xf32>
    %18 = vector.multi_reduction <maximumf>, %17, %cst_8 [1] : vector<16x16xf32> to vector<16xf32>
    %19 = vector.shape_cast %18 : vector<16xf32> to vector<16x1xf32>
    %20 = vector.broadcast %19 : vector<16x1xf32> to vector<16x16xf32>
    %21 = arith.subf %17, %20 : vector<16x16xf32>
    %22 = math.exp %21 : vector<16x16xf32>
    %cst_9 = arith.constant dense<0.000000e+00> : vector<16xf32>
    %23 = vector.multi_reduction <add>, %22, %cst_9 [1] : vector<16x16xf32> to vector<16xf32>
    %24 = vector.shape_cast %23 : vector<16xf32> to vector<16x1xf32>
    %25 = math.log %24 : vector<16x1xf32>
    %26 = arith.addf %19, %25 : vector<16x1xf32>
    %27 = arith.subf %26, %6 : vector<16x1xf32>
    %c0_10 = arith.constant 0 : index
    %c0_11 = arith.constant 0 : index
    %28 = vector.load %arg4[%c0_10, %c0_11] : memref<16x1xf32, #tpu.memory_space<vmem>>, vector<16x1xf32>
    tpu.vector_store %arg4[%c0_10, %c0_11], %27 {strides = array<i32>} : memref<16x1xf32, #tpu.memory_space<vmem>>, vector<16x1xf32>,
    return
  }
  func.func @transform_0(%arg0: i32) -> (i32, i32) {
    %c0_i32 = arith.constant 0 : i32
    %c0_i32_0 = arith.constant 0 : i32
    return %arg0, %c0_i32 : i32, i32
  }
  func.func @transform_1(%arg0: i32) -> (i32, i32) {
    %c0_i32 = arith.constant 0 : i32
    %c0_i32_0 = arith.constant 0 : i32
    %c0_i32_1 = arith.constant 0 : i32
    return %c0_i32, %c0_i32_0 : i32, i32
  }
  func.func @transform_2(%arg0: i32) -> (i32, i32) {
    %c0_i32 = arith.constant 0 : i32
    %c0_i32_0 = arith.constant 0 : i32
    return %arg0, %c0_i32 : i32, i32
  }
  func.func @transform_3(%arg0: i32) -> (i32, i32) {
    %c0_i32 = arith.constant 0 : i32
    %c0_i32_0 = arith.constant 0 : i32
    return %arg0, %c0_i32 : i32, i32
  }
}

module attributes {stable_mosaic.version = 11 : i64} {
  func.func @_ntxent_row_kernel(%arg0: i32, %arg1: memref<16x128xf32, #tpu.memory_space<vmem>>, %arg2: memref<128x16xf32, #tpu.memory_space<vmem>>, %arg3: memref<16x128xf32, #tpu.memory_space<vmem>>, %arg4: memref<16x1xf32, #tpu.memory_space<vmem>>) attributes {dimension_semantics = [#tpu.dimension_semantics<parallel>], iteration_bounds = array<i64: 1>, scalar_prefetch = 0 : i64, scratch_operands = 0 : i64, tpu.core_type = #tpu.core_type<tc>, window_params = [{transform_indices = @transform_0, window_bounds = array<i64: 16, 128>}, {pipeline_mode = #tpu.pipeline_mode<synchronous>, transform_indices = @transform_1, window_bounds = array<i64: 128, 16>}, {transform_indices = @transform_2, window_bounds = array<i64: 16, 128>}, {transform_indices = @transform_3, window_bounds = array<i64: 16, 1>}]} {
    %c0 = arith.constant 0 : index
    %c0_0 = arith.constant 0 : index
    %0 = vector.load %arg1[%c0, %c0_0] : memref<16x128xf32, #tpu.memory_space<vmem>>, vector<16x128xf32>
    %cst = arith.constant 2.000000e+00 : f32
    %1 = vector.broadcast %cst : f32 to vector<16x128xf32>
    %2 = arith.mulf %0, %1 : vector<16x128xf32>
    %c0_1 = arith.constant 0 : index
    %c0_2 = arith.constant 0 : index
    %3 = vector.load %arg3[%c0_1, %c0_2] : memref<16x128xf32, #tpu.memory_space<vmem>>, vector<16x128xf32>
    %4 = arith.mulf %2, %3 : vector<16x128xf32>
    %cst_3 = arith.constant dense<0.000000e+00> : vector<16xf32>
    %5 = vector.multi_reduction <add>, %4, %cst_3 [1] : vector<16x128xf32> to vector<16xf32>
    %6 = vector.shape_cast %5 : vector<16xf32> to vector<16x1xf32>
    %c0_4 = arith.constant 0 : index
    %c0_5 = arith.constant 0 : index
    %7 = vector.load %arg2[%c0_4, %c0_5] : memref<128x16xf32, #tpu.memory_space<vmem>>, vector<128x16xf32>
    %cst_6 = arith.constant dense<0.000000e+00> : vector<16x16xf32>
    %8 = tpu.matmul %2, %7, %cst_6 {dimension_numbers = #tpu.dot_dimension_numbers<[1], [0], [0], [1], [0, 0, 1, 1], [], []>} : vector<16x128xf32>, vector<128x16xf32>, vector<16x16xf32> -> vector<16x16xf32>
    %9 = tpu.iota {dimensions = array<i32: 1>} : vector<16x16xi32>
    %10 = tpu.iota {dimensions = array<i32: 0>} : vector<16x1xi32>
    %c16_i32 = arith.constant 16 : i32
    %11 = arith.muli %arg0, %c16_i32 : i32
    %12 = vector.broadcast %11 : i32 to vector<16x1xi32>
    %13 = arith.addi %10, %12 : vector<16x1xi32>
    %14 = vector.broadcast %13 : vector<16x1xi32> to vector<16x16xi32>
    %15 = arith.cmpi eq, %9, %14 : vector<16x16xi32>
    %cst_7 = arith.constant -1.000000e+30 : f32
    %16 = vector.broadcast %cst_7 : f32 to vector<16x16xf32>
    %17 = arith.select %15, %16, %8 : vector<16x16xi1>, vector<16x16xf32>
    %cst_8 = arith.constant dense<0xFF800000> : vector<16xf32>
    %18 = vector.multi_reduction <maximumf>, %17, %cst_8 [1] : vector<16x16xf32> to vector<16xf32>
    %19 = vector.shape_cast %18 : vector<16xf32> to vector<16x1xf32>
    %20 = vector.broadcast %19 : vector<16x1xf32> to vector<16x16xf32>
    %21 = arith.subf %17, %20 : vector<16x16xf32>
    %22 = math.exp %21 : vector<16x16xf32>
    %cst_9 = arith.constant dense<0.000000e+00> : vector<16xf32>
    %23 = vector.multi_reduction <add>, %22, %cst_9 [1] : vector<16x16xf32> to vector<16xf32>
    %24 = vector.shape_cast %23 : vector<16xf32> to vector<16x1xf32>
    %25 = math.log %24 : vector<16x1xf32>
    %26 = arith.addf %19, %25 : vector<16x1xf32>
    %27 = arith.subf %26, %6 : vector<16x1xf32>
    %c0_10 = arith.constant 0 : index
    %c0_11 = arith.constant 0 : index
    %28 = vector.load %arg4[%c0_10, %c0_11] : memref<16x1xf32, #tpu.memory_space<vmem>>, vector<16x1xf32>
    tpu.vector_store %arg4[%c0_10, %c0_11], %27 {strides = array<i32>} : memref<16x1xf32, #tpu.memory_space<vmem>>, vector<16x1xf32>,
    return
  }
  func.func @transform_0(%arg0: i32) -> (i32, i32) {
    %c0_i32 = arith.constant 0 : i32
    %c0_i32_0 = arith.constant 0 : i32
    return %arg0, %c0_i32 : i32, i32
  }
  func.func @transform_1(%arg0: i32) -> (i32, i32) {
    %c0_i32 = arith.constant 0 : i32
    %c0_i32_0 = arith.constant 0 : i32
    %c0_i32_1 = arith.constant 0 : i32
    return %c0_i32, %c0_i32_0 : i32, i32
  }
  func.func @transform_2(%arg0: i32) -> (i32, i32) {
    %c0_i32 = arith.constant 0 : i32
    %c0_i32_0 = arith.constant 0 : i32
    return %arg0, %c0_i32 : i32, i32
  }
  func.func @transform_3(%arg0: i32) -> (i32, i32) {
    %c0_i32 = arith.constant 0 : i32
    %c0_i32_0 = arith.constant 0 : i32
    return %arg0, %c0_i32 : i32, i32
  }
}

</mosaic_0001>

<llo_original>
// kernel: tpu_custom_call.1
$region0: #{tpu_custom_call.1}
  #allocation0 [shape = 'u32[]', space=smem, size = 0x4, offset = 0x4, fixed_abs, tag = 'smem constant byte address 0x4 - core index']
  #allocation1 [shape = 'u32[144,128]{1,0:T(1,128)}', space=vmem, size = 0x12000, scoped, tag = 'internal scratch']
  %s0 = inlined_call_operand.vmem [shape: f32[16,128], index: 0, kind: input, shape index: {}]
  %s1 = inlined_call_operand.vmem [shape: f32[128,16], index: 1, kind: input, shape index: {}]
  %s2 = inlined_call_operand.vmem [shape: f32[16,128], index: 2, kind: input, shape index: {}]
  %s3 = inlined_call_operand.vmem [shape: f32[16,1], index: 3, kind: output, shape index: {}]
  %s4 = sld [smem:[#allocation0]]
  $region22: #{tpu_custom_call.1} parent=0
    _
  %s6 = ssub.s32 1, %s4
  %s7 = scalar_select 0, %s6, %s4
  // Predicated region
  $region2: #{tpu_custom_call.1} parent=0 // pred_check
    _
  $region3: #{tpu_custom_call.1} parent=0 // pred_check_branch
    %9 = sbr.rel (0) target = $region5
  $region4: #{tpu_custom_call.1} parent=0 // pred_region
    _
  $region5: #{tpu_custom_call.1} parent=0 // pred_fallthru
    _
  // Predicated region
  $region6: #{tpu_custom_call.1} parent=0 // pred_check
    _
  $region7: #{tpu_custom_call.1} parent=0 // pred_check_branch
    %11 = sbr.rel (0) target = $region9
  $region8: #{tpu_custom_call.1} parent=0 // pred_region
    _
  $region9: #{tpu_custom_call.1} parent=0 // pred_fallthru
    _
  // Predicated region
  $region10: #{tpu_custom_call.1} parent=0 // pred_check
    _
  $region11: #{tpu_custom_call.1} parent=0 // pred_check_branch
    %13 = sbr.rel (0) target = $region13
  $region12: #{tpu_custom_call.1} parent=0 // pred_region
    _
  $region13: #{tpu_custom_call.1} parent=0 // pred_fallthru
    _
  %v14 = vld [vmem:[%s0] sm:$0xff]
  %v15 = vld [vmem:[%s0 + $0x8] sm:$0xff]
  %v16 = vmul.f32 %v14, 2.0
  %v17 = vmul.f32 %v15, 2.0
  %v18 = vld [vmem:[%s2] sm:$0xff]
  %v19 = vld [vmem:[%s2 + $0x8] sm:$0xff]
  %v20 = vmul.f32 %v16, %v18
  %v21 = vmul.f32 %v17, %v19
  %22 = vadd.xlane.f32.xlu0 %v20
  %v23 = vpop.xlane.xlu0 %22
  %24 = vadd.xlane.f32.xlu0 %v21
  %v25 = vpop.xlane.xlu0 %24
  %v26 = vld [vmem:[%s1] sm:$0xff]
  %v27 = vld [vmem:[%s1 + $0x8] sm:$0xff]
  %v28 = vld [vmem:[%s1 + $0x10] sm:$0xff]
  %v29 = vld [vmem:[%s1 + $0x18] sm:$0xff]
  %v30 = vld [vmem:[%s1 + $0x20] sm:$0xff]
  %v31 = vld [vmem:[%s1 + $0x28] sm:$0xff]
  %v32 = vld [vmem:[%s1 + $0x30] sm:$0xff]
  %v33 = vld [vmem:[%s1 + $0x38] sm:$0xff]
  %v34 = vld [vmem:[%s1 + $0x40] sm:$0xff]
  %v35 = vld [vmem:[%s1 + $0x48] sm:$0xff]
  %v36 = vld [vmem:[%s1 + $0x50] sm:$0xff]
  %v37 = vld [vmem:[%s1 + $0x58] sm:$0xff]
  %v38 = vld [vmem:[%s1 + $0x60] sm:$0xff]
  %v39 = vld [vmem:[%s1 + $0x68] sm:$0xff]
  %v40 = vld [vmem:[%s1 + $0x70] sm:$0xff]
  %v41 = vld [vmem:[%s1 + $0x78] sm:$0xff]
  %42 = vmatprep.subr.mxu0 0.0
  %43 = vmatpush1.msra.mxu0 %v41
  %44 = vmatprep.subr.mxu0 0.0
  %45 = vmatpush1.msra.mxu0 %v40
  %46 = vmatprep.subr.mxu0 0.0
  %47 = vmatpush1.msra.mxu0 %v39
  %48 = vmatprep.subr.mxu0 0.0
  %49 = vmatpush1.msra.mxu0 %v38
  %50 = vmatprep.subr.mxu0 0.0
  %51 = vmatpush1.msra.mxu0 %v37
  %52 = vmatprep.subr.mxu0 0.0
  %53 = vmatpush1.msra.mxu0 %v36
  %54 = vmatprep.subr.mxu0 0.0
  %55 = vmatpush1.msra.mxu0 %v35
  %56 = vmatprep.subr.mxu0 0.0
  %57 = vmatpush1.msra.mxu0 %v34
  %58 = vmatprep.subr.mxu0 0.0
  %59 = vmatpush1.msra.mxu0 %v33
  %60 = vmatprep.subr.mxu0 0.0
  %61 = vmatpush1.msra.mxu0 %v32
  %62 = vmatprep.subr.mxu0 0.0
  %63 = vmatpush1.msra.mxu0 %v31
  %64 = vmatprep.subr.mxu0 0.0
  %65 = vmatpush1.msra.mxu0 %v30
  %66 = vmatprep.subr.mxu0 0.0
  %67 = vmatpush1.msra.mxu0 %v29
  %68 = vmatprep.subr.mxu0 0.0
  %69 = vmatpush1.msra.mxu0 %v28
  %70 = vmatprep.subr.mxu0 0.0
  %71 = vmatpush1.msra.mxu0 %v27
  %72 = vmatprep.subr.mxu0 0.0
  %73 = vmatpush1.msra.mxu0 %v26
  %74 = vmatprep.subr.mxu0 0.0
  %75 = vmatpush2.msra.mxu0 0.0
  %76 = vmatprep.subr.mxu0 0.0
  %77 = vmatpush2.msra.mxu0 0.0
  %78 = vmatprep.subr.mxu0 0.0
  %79 = vmatpush2.msra.mxu0 0.0
  %80 = vmatprep.subr.mxu0 0.0
  %81 = vmatpush2.msra.mxu0 0.0
  %82 = vmatprep.subr.mxu0 0.0
  %83 = vmatpush2.msra.mxu0 0.0
  %84 = vmatprep.subr.mxu0 0.0
  %85 = vmatpush2.msra.mxu0 0.0
  %86 = vmatprep.subr.mxu0 0.0
  %87 = vmatpush2.msra.mxu0 0.0
  %88 = vmatprep.subr.mxu0 0.0
  %89 = vmatpush2.msra.mxu0 0.0
  %90 = vmatprep.subr.mxu0 0.0
  %91 = vmatpush2.msra.mxu0 0.0
  %92 = vmatprep.subr.mxu0 0.0
  %93 = vmatpush2.msra.mxu0 0.0
  %94 = vmatprep.subr.mxu0 0.0
  %95 = vmatpush2.msra.mxu0 0.0
  %96 = vmatprep.subr.mxu0 0.0
  %97 = vmatpush2.msra.mxu0 0.0
  %98 = vmatprep.subr.mxu0 0.0
  %99 = vmatpush2.msra.mxu0 0.0
  %100 = vmatprep.subr.mxu0 0.0
  %101 = vmatpush2.msra.mxu0 0.0
  %102 = vmatprep.subr.mxu0 0.0
  %103 = vmatpush2.msra.mxu0 0.0
  %104 = vmatprep.subr.mxu0 0.0
  %105 = vmatpush2.msra.mxu0 0.0
  %106 = vmatprep.mubr.f32.mxu0 0.0
  %107 = vmatmul.mubr.f32.gmra.mxu0 %v16
  %v108 = vpop.f32.mrf.mxu0
  %v109 = vadd.f32 0.0, %v108
  %v110 = vpop.f32.mrf.mxu0
  %111 = vmatprep.mubr.f32.mxu0 0.0
  %112 = vmatmul.mubr.f32.gmra.mxu0 %v17
  %v113 = vpop.f32.mrf.mxu0
  %v114 = vadd.f32 0.0, %v113
  %v115 = vpop.f32.mrf.mxu0
  %116 = vdwg.mxu0
  %v117 = vlaneseq
  %v118 = vand.u32 %v117, 127
  %v119 = vlaneseq
  %v120 = vshrl.u32 %v119, 7
  %v121 = vadd.s32 %v120, 8
  %s122 = smul.u32 0, 16
  %v123 = vstv %s122
  %v124 = vadd.s32 %v120, %v123
  %v125 = vadd.s32 %v121, %v123
  %vm126 = vcmp.eq.s32.totalorder %v118, %v124
  %vm127 = vcmp.eq.s32.totalorder %v118, %v125
  %v128 = vsel %vm126, -1e+30, %v109
  %v129 = vsel %vm127, -1e+30, %v114
  %vm130 = vcmask 130048
  %v131 = vsel %vm130, %v128, -inf
  %132 = vmax.xlane.f32.xlu0 %v131
  %v133 = vpop.xlane.xlu0 %132
  %v134 = vsel %vm130, %v129, -inf
  %135 = vmax.xlane.f32.xlu0 %v134
  %v136 = vpop.xlane.xlu0 %135
  %v137 = vsub.f32 %v128, %v133
  %v138 = vsub.f32 %v129, %v136
  %v139 = vmul.f32 %v137, 1.442695
  %v140 = vpow.pop %v139
  %v141 = vmul.f32 %v138, 1.442695
  %v142 = vpow.pop %v141
  %v143 = vsel %vm130, %v140, 0.0
  %144 = vadd.xlane.f32.xlu0 %v143
  %v145 = vpop.xlane.xlu0 %144
  %v146 = vsel %vm130, %v142, 0.0
  %147 = vadd.xlane.f32.xlu0 %v146
  %v148 = vpop.xlane.xlu0 %147
  %v149 = vlog2.pop %v145
  %v150 = vmul.f32 %v149, 0.6931472
  %v151 = vlog2.pop %v148
  %v152 = vmul.f32 %v151, 0.6931472
  %v153 = vadd.f32 %v133, %v150
  %v154 = vadd.f32 %v136, %v152
  %v155 = vsub.f32 %v153, %v23
  %v156 = vsub.f32 %v154, %v25
  %vm157 = vcmask 7168
  %158 = vst.msk [vmem:[%s3] sm:$0xff] %vm157, %v155
  %159 = vst.msk [vmem:[%s3 + $0x8] sm:$0xff] %vm157, %v156
  // Predicated region
  $region14: #{tpu_custom_call.1} parent=0 // pred_check
    _
  $region15: #{tpu_custom_call.1} parent=0 // pred_check_branch
    %161 = sbr.rel (0) target = $region17
  $region16: #{tpu_custom_call.1} parent=0 // pred_region
    _
  $region17: #{tpu_custom_call.1} parent=0 // pred_fallthru
    _
  // Predicated region
  $region18: #{tpu_custom_call.1} parent=0 // pred_check
    _
  $region19: #{tpu_custom_call.1} parent=0 // pred_check_branch
    %163 = sbr.rel (0) target = $region21
  $region20: #{tpu_custom_call.1} parent=0 // pred_region
    _
  $region21: #{tpu_custom_call.1} parent=0 // pred_fallthru
    _

// kernel: tpu_custom_call.1
$region0: #{tpu_custom_call.1}
  #allocation0 [shape = 'u32[]', space=smem, size = 0x4, offset = 0x4, fixed_abs, tag = 'smem constant byte address 0x4 - core index']
  #allocation1 [shape = 'u32[144,128]{1,0:T(1,128)}', space=vmem, size = 0x12000, scoped, tag = 'internal scratch']
  %s0 = inlined_call_operand.vmem [shape: f32[16,128], index: 0, kind: input, shape index: {}]
  %s1 = inlined_call_operand.vmem [shape: f32[128,16], index: 1, kind: input, shape index: {}]
  %s2 = inlined_call_operand.vmem [shape: f32[16,128], index: 2, kind: input, shape index: {}]
  %s3 = inlined_call_operand.vmem [shape: f32[16,1], index: 3, kind: output, shape index: {}]
  %s4 = sld [smem:[#allocation0]]
  $region22: #{tpu_custom_call.1} parent=0
    _
  %s6 = ssub.s32 1, %s4
  %s7 = scalar_select 0, %s6, %s4
  // Predicated region
  $region2: #{tpu_custom_call.1} parent=0 // pred_check
    _
  $region3: #{tpu_custom_call.1} parent=0 // pred_check_branch
    %9 = sbr.rel (0) target = $region5
  $region4: #{tpu_custom_call.1} parent=0 // pred_region
    _
  $region5: #{tpu_custom_call.1} parent=0 // pred_fallthru
    _
  // Predicated region
  $region6: #{tpu_custom_call.1} parent=0 // pred_check
    _
  $region7: #{tpu_custom_call.1} parent=0 // pred_check_branch
    %11 = sbr.rel (0) target = $region9
  $region8: #{tpu_custom_call.1} parent=0 // pred_region
    _
  $region9: #{tpu_custom_call.1} parent=0 // pred_fallthru
    _
  // Predicated region
  $region10: #{tpu_custom_call.1} parent=0 // pred_check
    _
  $region11: #{tpu_custom_call.1} parent=0 // pred_check_branch
    %13 = sbr.rel (0) target = $region13
  $region12: #{tpu_custom_call.1} parent=0 // pred_region
    _
  $region13: #{tpu_custom_call.1} parent=0 // pred_fallthru
    _
  %v14 = vld [vmem:[%s0] sm:$0xff]
  %v15 = vld [vmem:[%s0 + $0x8] sm:$0xff]
  %v16 = vmul.f32 %v14, 2.0
  %v17 = vmul.f32 %v15, 2.0
  %v18 = vld [vmem:[%s2] sm:$0xff]
  %v19 = vld [vmem:[%s2 + $0x8] sm:$0xff]
  %v20 = vmul.f32 %v16, %v18
  %v21 = vmul.f32 %v17, %v19
  %22 = vadd.xlane.f32.xlu0 %v20
  %v23 = vpop.xlane.xlu0 %22
  %24 = vadd.xlane.f32.xlu0 %v21
  %v25 = vpop.xlane.xlu0 %24
  %v26 = vld [vmem:[%s1] sm:$0xff]
  %v27 = vld [vmem:[%s1 + $0x8] sm:$0xff]
  %v28 = vld [vmem:[%s1 + $0x10] sm:$0xff]
  %v29 = vld [vmem:[%s1 + $0x18] sm:$0xff]
  %v30 = vld [vmem:[%s1 + $0x20] sm:$0xff]
  %v31 = vld [vmem:[%s1 + $0x28] sm:$0xff]
  %v32 = vld [vmem:[%s1 + $0x30] sm:$0xff]
  %v33 = vld [vmem:[%s1 + $0x38] sm:$0xff]
  %v34 = vld [vmem:[%s1 + $0x40] sm:$0xff]
  %v35 = vld [vmem:[%s1 + $0x48] sm:$0xff]
  %v36 = vld [vmem:[%s1 + $0x50] sm:$0xff]
  %v37 = vld [vmem:[%s1 + $0x58] sm:$0xff]
  %v38 = vld [vmem:[%s1 + $0x60] sm:$0xff]
  %v39 = vld [vmem:[%s1 + $0x68] sm:$0xff]
  %v40 = vld [vmem:[%s1 + $0x70] sm:$0xff]
  %v41 = vld [vmem:[%s1 + $0x78] sm:$0xff]
  %42 = vmatprep.subr.mxu0 0.0
  %43 = vmatpush1.msra.mxu0 %v41
  %44 = vmatprep.subr.mxu0 0.0
  %45 = vmatpush1.msra.mxu0 %v40
  %46 = vmatprep.subr.mxu0 0.0
  %47 = vmatpush1.msra.mxu0 %v39
  %48 = vmatprep.subr.mxu0 0.0
  %49 = vmatpush1.msra.mxu0 %v38
  %50 = vmatprep.subr.mxu0 0.0
  %51 = vmatpush1.msra.mxu0 %v37
  %52 = vmatprep.subr.mxu0 0.0
  %53 = vmatpush1.msra.mxu0 %v36
  %54 = vmatprep.subr.mxu0 0.0
  %55 = vmatpush1.msra.mxu0 %v35
  %56 = vmatprep.subr.mxu0 0.0
  %57 = vmatpush1.msra.mxu0 %v34
  %58 = vmatprep.subr.mxu0 0.0
  %59 = vmatpush1.msra.mxu0 %v33
  %60 = vmatprep.subr.mxu0 0.0
  %61 = vmatpush1.msra.mxu0 %v32
  %62 = vmatprep.subr.mxu0 0.0
  %63 = vmatpush1.msra.mxu0 %v31
  %64 = vmatprep.subr.mxu0 0.0
  %65 = vmatpush1.msra.mxu0 %v30
  %66 = vmatprep.subr.mxu0 0.0
  %67 = vmatpush1.msra.mxu0 %v29
  %68 = vmatprep.subr.mxu0 0.0
  %69 = vmatpush1.msra.mxu0 %v28
  %70 = vmatprep.subr.mxu0 0.0
  %71 = vmatpush1.msra.mxu0 %v27
  %72 = vmatprep.subr.mxu0 0.0
  %73 = vmatpush1.msra.mxu0 %v26
  %74 = vmatprep.subr.mxu0 0.0
  %75 = vmatpush2.msra.mxu0 0.0
  %76 = vmatprep.subr.mxu0 0.0
  %77 = vmatpush2.msra.mxu0 0.0
  %78 = vmatprep.subr.mxu0 0.0
  %79 = vmatpush2.msra.mxu0 0.0
  %80 = vmatprep.subr.mxu0 0.0
  %81 = vmatpush2.msra.mxu0 0.0
  %82 = vmatprep.subr.mxu0 0.0
  %83 = vmatpush2.msra.mxu0 0.0
  %84 = vmatprep.subr.mxu0 0.0
  %85 = vmatpush2.msra.mxu0 0.0
  %86 = vmatprep.subr.mxu0 0.0
  %87 = vmatpush2.msra.mxu0 0.0
  %88 = vmatprep.subr.mxu0 0.0
  %89 = vmatpush2.msra.mxu0 0.0
  %90 = vmatprep.subr.mxu0 0.0
  %91 = vmatpush2.msra.mxu0 0.0
  %92 = vmatprep.subr.mxu0 0.0
  %93 = vmatpush2.msra.mxu0 0.0
  %94 = vmatprep.subr.mxu0 0.0
  %95 = vmatpush2.msra.mxu0 0.0
  %96 = vmatprep.subr.mxu0 0.0
  %97 = vmatpush2.msra.mxu0 0.0
  %98 = vmatprep.subr.mxu0 0.0
  %99 = vmatpush2.msra.mxu0 0.0
  %100 = vmatprep.subr.mxu0 0.0
  %101 = vmatpush2.msra.mxu0 0.0
  %102 = vmatprep.subr.mxu0 0.0
  %103 = vmatpush2.msra.mxu0 0.0
  %104 = vmatprep.subr.mxu0 0.0
  %105 = vmatpush2.msra.mxu0 0.0
  %106 = vmatprep.mubr.f32.mxu0 0.0
  %107 = vmatmul.mubr.f32.gmra.mxu0 %v16
  %v108 = vpop.f32.mrf.mxu0
  %v109 = vadd.f32 0.0, %v108
  %v110 = vpop.f32.mrf.mxu0
  %111 = vmatprep.mubr.f32.mxu0 0.0
  %112 = vmatmul.mubr.f32.gmra.mxu0 %v17
  %v113 = vpop.f32.mrf.mxu0
  %v114 = vadd.f32 0.0, %v113
  %v115 = vpop.f32.mrf.mxu0
  %116 = vdwg.mxu0
  %v117 = vlaneseq
  %v118 = vand.u32 %v117, 127
  %v119 = vlaneseq
  %v120 = vshrl.u32 %v119, 7
  %v121 = vadd.s32 %v120, 8
  %s122 = smul.u32 0, 16
  %v123 = vstv %s122
  %v124 = vadd.s32 %v120, %v123
  %v125 = vadd.s32 %v121, %v123
  %vm126 = vcmp.eq.s32.totalorder %v118, %v124
  %vm127 = vcmp.eq.s32.totalorder %v118, %v125
  %v128 = vsel %vm126, -1e+30, %v109
  %v129 = vsel %vm127, -1e+30, %v114
  %vm130 = vcmask 130048
  %v131 = vsel %vm130, %v128, -inf
  %132 = vmax.xlane.f32.xlu0 %v131
  %v133 = vpop.xlane.xlu0 %132
  %v134 = vsel %vm130, %v129, -inf
  %135 = vmax.xlane.f32.xlu0 %v134
  %v136 = vpop.xlane.xlu0 %135
  %v137 = vsub.f32 %v128, %v133
  %v138 = vsub.f32 %v129, %v136
  %v139 = vmul.f32 %v137, 1.442695
  %v140 = vpow.pop %v139
  %v141 = vmul.f32 %v138, 1.442695
  %v142 = vpow.pop %v141
  %v143 = vsel %vm130, %v140, 0.0
  %144 = vadd.xlane.f32.xlu0 %v143
  %v145 = vpop.xlane.xlu0 %144
  %v146 = vsel %vm130, %v142, 0.0
  %147 = vadd.xlane.f32.xlu0 %v146
  %v148 = vpop.xlane.xlu0 %147
  %v149 = vlog2.pop %v145
  %v150 = vmul.f32 %v149, 0.6931472
  %v151 = vlog2.pop %v148
  %v152 = vmul.f32 %v151, 0.6931472
  %v153 = vadd.f32 %v133, %v150
  %v154 = vadd.f32 %v136, %v152
  %v155 = vsub.f32 %v153, %v23
  %v156 = vsub.f32 %v154, %v25
  %vm157 = vcmask 7168
  %158 = vst.msk [vmem:[%s3] sm:$0xff] %vm157, %v155
  %159 = vst.msk [vmem:[%s3 + $0x8] sm:$0xff] %vm157, %v156
  // Predicated region
  $region14: #{tpu_custom_call.1} parent=0 // pred_check
    _
  $region15: #{tpu_custom_call.1} parent=0 // pred_check_branch
    %161 = sbr.rel (0) target = $region17
  $region16: #{tpu_custom_call.1} parent=0 // pred_region
    _
  $region17: #{tpu_custom_call.1} parent=0 // pred_fallthru
    _
  // Predicated region
  $region18: #{tpu_custom_call.1} parent=0 // pred_check
    _
  $region19: #{tpu_custom_call.1} parent=0 // pred_check_branch
    %163 = sbr.rel (0) target = $region21
  $region20: #{tpu_custom_call.1} parent=0 // pred_region
    _
  $region21: #{tpu_custom_call.1} parent=0 // pred_fallthru
    _

</llo_original>
